<compile_context>
chip_gen: v6e
topology: v6e:2x2x1
jax: 0.10.0
libtpu: 0.0.40
codegen_flags: <defaults>
</compile_context>

<pallas_src>
import functools

import numpy as np
import jax
import jax.numpy as jnp
from jax.experimental import pallas as pl
from jax.experimental.pallas import tpu as pltpu

# deterministic loss-term weights (stand-ins for Objective/Constraint.weight)
W_OBJ1 = 1.0
W_OBJ2 = 0.1
W_C1 = 10.0
W_C2 = 10.0
W_C3 = 100.0

N_CON = 3       # number of constraint terms
N_PARTIAL = 5   # partial sums: sq_err, x^2, g1, g2, g3
PART_ROWS = 8   # sublane-padded rows in the partial-sum block


def _round_up(x, m):
    return (x + m - 1) // m * m


def _aggregate_loss_kernel(x_ref, yp_ref, yt_ref, xmin_ref, xmax_ref, xtgt_ref,
                           cval_ref, cviol_ref, part_ref, *, batch, tb):
    D = x_ref.shape[-1]
    x = x_ref[...]
    yp = yp_ref[...]
    yt = yt_ref[...]
    xmin = xmin_ref[...]      # (tb, D) or (1, D) -> broadcasts
    xmax = xmax_ref[...]
    xt = xtgt_ref[...]

    # ---- constraint values / violations (elementwise hot path) ----
    v1 = x - xmax                      # ineq: x <= xmax
    g1 = jnp.maximum(v1, 0.0)
    v2 = xmin - x                      # ineq: x >= xmin
    g2 = jnp.maximum(v2, 0.0)
    v3 = x - xt                        # eq:   x == x_ref
    g3 = jnp.abs(v3)

    # Lane-contiguous stores into the [tb, 3*D] concat layout
    # (offsets 0, D, 2*D; unmasked when D % 128 == 0).  Out-of-bounds tail
    # rows (if B % tb != 0) are dropped by Pallas on write-back.
    cval_ref[:, 0:D] = v1
    cval_ref[:, D:2 * D] = v2
    cval_ref[:, 2 * D:3 * D] = v3
    cviol_ref[:, 0:D] = g1
    cviol_ref[:, D:2 * D] = g2
    cviol_ref[:, 2 * D:3 * D] = g3

    # ---- per-block, per-lane partial sums ----
    sq = (yp - yt) * (yp - yt)        # objective 1 contributions
    xsq = x * x                       # objective 2 contributions
    g1s, g2s, g3s = g1, g2, g3

    if batch % tb != 0:
        # Tail block reads unspecified padding rows; mask them out of the sums
        # (select, not multiply, so NaN/Inf garbage cannot leak through).
        row = jax.lax.broadcasted_iota(jnp.int32, (tb, D), 0)
        limit = batch - pl.program_id(0) * tb
        mask = row < limit
        zero = jnp.zeros_like(sq)
        sq = jnp.where(mask, sq, zero)
        xsq = jnp.where(mask, xsq, zero)
        g1s = jnp.where(mask, g1s, zero)
        g2s = jnp.where(mask, g2s, zero)
        g3s = jnp.where(mask, g3s, zero)

    # Reduce over rows only (sublane reduction); lane reduction + weights are
    # finished in the wrapper on a tiny (nblocks*8, D) array.
    part_ref[0:1, :] = jnp.sum(sq, axis=0, keepdims=True)
    part_ref[1:2, :] = jnp.sum(xsq, axis=0, keepdims=True)
    part_ref[2:3, :] = jnp.sum(g1s, axis=0, keepdims=True)
    part_ref[3:4, :] = jnp.sum(g2s, axis=0, keepdims=True)
    part_ref[4:5, :] = jnp.sum(g3s, axis=0, keepdims=True)
    part_ref[N_PARTIAL:, :] = jnp.zeros((PART_ROWS - N_PARTIAL, D), jnp.float32)


def _in_spec(shape, tb):
    rows, cols = shape
    if rows == 1:
        # batch-broadcast input (per-feature bounds / targets): fetched once
        return pl.BlockSpec((1, cols), lambda i: (0, 0))
    return pl.BlockSpec((tb, cols), lambda i: (i, 0))


@functools.partial(jax.jit, static_argnames=("tb",))
def aggregate_loss(x, y_pred, y_true, xmin, xmax, x_target, *, tb=None):
    def prep(a):
        a = jnp.asarray(a, jnp.float32)
        if a.ndim == 1:
            a = a[None, :]
        return a

    x, y_pred, y_true, xmin, xmax, x_target = map(
        prep, (x, y_pred, y_true, xmin, xmax, x_target))
    B, D = x.shape
    inputs = (x, y_pred, y_true, xmin, xmax, x_target)

    # ---- batch-tile selection ----
    # Streamed bytes per batch row: every full-batch input plus both (3*D)
    # outputs.  Batch-broadcast (1, D) inputs are fetched once, not per row.
    streamed_bytes_per_row = (
        sum(D for a in inputs if a.shape[0] != 1) + 2 * N_CON * D) * 4
    if tb is None:
        # ~12 MiB streamed per grid step (~24 MiB live when double-buffered).
        tb = (12 * 1024 * 1024) // max(streamed_bytes_per_row, 1)
        tb = max(8, min(tb, 2048) // 8 * 8)
        # >= ~4 grid blocks so both v7x TensorCores get work and the DMA
        # pipeline has something to overlap.
        tb = min(tb, max(8, _round_up(pl.cdiv(B, 4), 8)))
    tb = int(max(8, (min(tb, 2048) // 8) * 8))
    tb = min(tb, _round_up(B, 8))
    nblocks = pl.cdiv(B, tb)

    kernel = functools.partial(_aggregate_loss_kernel, batch=B, tb=tb)

    out_shapes = (
        jax.ShapeDtypeStruct((B, N_CON * D), jnp.float32),        # C_values
        jax.ShapeDtypeStruct((B, N_CON * D), jnp.float32),        # C_violations
        jax.ShapeDtypeStruct((nblocks * PART_ROWS, D), jnp.float32),  # partials
    )
    grid_spec = pltpu.PrefetchScalarGridSpec(
        num_scalar_prefetch=0,
        grid=(nblocks,),
        in_specs=[_in_spec(a.shape, tb) for a in inputs],
        out_specs=(
            pl.BlockSpec((tb, N_CON * D), lambda i: (i, 0)),
            pl.BlockSpec((tb, N_CON * D), lambda i: (i, 0)),
            pl.BlockSpec((PART_ROWS, D), lambda i: (i, 0)),
        ),
    )
    c_values, c_violations, partials = pl.pallas_call(
        kernel,
        out_shape=out_shapes,
        grid_spec=grid_spec,
        compiler_params=pltpu.CompilerParams(
            dimension_semantics=("parallel",),   # shards over both TCs on v7x
            vmem_limit_bytes=40 * 1024 * 1024,
        ),
    )(*inputs)

    # ---- finish the reductions: sum per-block / per-lane partials, fold W ----
    psum = jnp.sum(
        partials.reshape(nblocks, PART_ROWS, D)[:, :N_PARTIAL, :], axis=(0, 2))
    inv_n = 1.0 / float(B * D)
    objective_loss = (W_OBJ1 * psum[0] + W_OBJ2 * psum[1]) * inv_n
    penalty_loss = (W_C1 * psum[2] + W_C2 * psum[3] + W_C3 * psum[4]) * inv_n

    # eq / ineq splits: static contiguous column slices (c1, c2 ineq; c3 eq).
    return {
        "loss": objective_loss + penalty_loss,
        "objective_loss": objective_loss,
        "penalty_loss": penalty_loss,
        "C_values": c_values,
        "C_violations": c_violations,
        "C_eq_values": c_values[:, 2 * D:3 * D],
        "C_ineq_values": c_values[:, 0:2 * D],
        "C_eq_violations": c_violations[:, 2 * D:3 * D],
        "C_ineq_violations": c_violations[:, 0:2 * D],
    }


def _reference(x, y_pred, y_true, xmin, xmax, x_target):
    """Pure-JAX reference for correctness checking (handles broadcasting)."""
    obj = W_OBJ1 * jnp.mean((y_pred - y_true) ** 2) + W_OBJ2 * jnp.mean(x ** 2)
    v1 = x - xmax
    v2 = xmin - x
    v3 = x - x_target
    g1, g2, g3 = jnp.maximum(v1, 0.0), jnp.maximum(v2, 0.0), jnp.abs(v3)
    pen = W_C1 * jnp.mean(g1) + W_C2 * jnp.mean(g2) + W_C3 * jnp.mean(g3)
    cval = jnp.concatenate([v1, v2, v3], axis=-1)
    cviol = jnp.concatenate([g1, g2, g3], axis=-1)
    return obj, pen, obj + pen, cval, cviol


def _check(out, x, y_pred, y_true, xmin, xmax, x_target):
    obj_r, pen_r, loss_r, cval_r, cviol_r = _reference(
        x, y_pred, y_true, xmin, xmax, x_target)
    B, D = x.shape
    np.testing.assert_allclose(out["objective_loss"], obj_r, rtol=1e-4, atol=1e-5)
    np.testing.assert_allclose(out["penalty_loss"], pen_r, rtol=1e-4, atol=1e-5)
    np.testing.assert_allclose(out["loss"], loss_r, rtol=1e-4, atol=1e-5)
    np.testing.assert_allclose(out["C_values"], cval_r, rtol=1e-5, atol=1e-5)
    np.testing.assert_allclose(out["C_violations"], cviol_r, rtol=1e-5, atol=1e-5)
    np.testing.assert_allclose(out["C_eq_values"], cval_r[:, 2 * D:3 * D],
                               rtol=1e-6, atol=1e-6)
    np.testing.assert_allclose(out["C_ineq_values"], cval_r[:, 0:2 * D],
                               rtol=1e-6, atol=1e-6)
    np.testing.assert_allclose(out["C_eq_violations"], cviol_r[:, 2 * D:3 * D],
                               rtol=1e-6, atol=1e-6)
    np.testing.assert_allclose(out["C_ineq_violations"], cviol_r[:, 0:2 * D],
                               rtol=1e-6, atol=1e-6)
    assert out["C_eq_violations"].shape == (B, D)
    assert out["C_ineq_violations"].shape == (B, 2 * D)


if __name__ == "__main__":
    # Case 1: non-divisible batch (exercises the in-kernel tail masking — no
    # jnp.pad / output slicing), per-feature (1, D) bounds broadcast along
    # batch (less HBM traffic), full (B, D) target.
    B, D = 100, 128   # D multiple of 128 -> lane-dense, unmasked stores
    key = jax.random.PRNGKey(0)
    k1, k2, k3, k4, k5, k6, k7, k8, k9, k10, k11, k12 = jax.random.split(key, 12)
    x = jax.random.normal(k1, (B, D), jnp.float32)
    y_pred = jax.random.normal(k2, (B, D), jnp.float32)
    y_true = jax.random.normal(k3, (B, D), jnp.float32)
    xmin = -0.5 + 0.1 * jax.random.normal(k4, (1, D), jnp.float32)
    xmax = 0.5 + 0.1 * jax.random.normal(k5, (1, D), jnp.float32)
    x_target = jax.random.normal(k6, (B, D), jnp.float32)

    out = aggregate_loss(x, y_pred, y_true, xmin, xmax, x_target)  # auto tile
    jax.block_until_ready(out)
    _check(out, x, y_pred, y_true, xmin, xmax, x_target)

    # Case 2: divisible batch, all inputs full (B, D) (no masking path,
    # streamed-bounds BlockSpecs).
    B2 = 64
    x2 = jax.random.normal(k7, (B2, D), jnp.float32)
    yp2 = jax.random.normal(k8, (B2, D), jnp.float32)
    yt2 = jax.random.normal(k9, (B2, D), jnp.float32)
    xmin2 = -0.5 + 0.1 * jax.random.normal(k10, (B2, D), jnp.float32)
    xmax2 = 0.5 + 0.1 * jax.random.normal(k11, (B2, D), jnp.float32)
    xt2 = jax.random.normal(k12, (B2, D), jnp.float32)

    out2 = aggregate_loss(x2, yp2, yt2, xmin2, xmax2, xt2)
    jax.block_until_ready(out2)
    _check(out2, x2, yp2, yt2, xmin2, xmax2, xt2)

    print("KERNEL_OK")
</pallas_src>

<mosaic_0001>
module attributes {stable_mosaic.version = 11 : i64} {
  func.func @_aggregate_loss_kernel(%arg0: i32, %arg1: memref<32x128xf32, #tpu.memory_space<vmem>>, %arg2: memref<32x128xf32, #tpu.memory_space<vmem>>, %arg3: memref<32x128xf32, #tpu.memory_space<vmem>>, %arg4: memref<1x128xf32, #tpu.memory_space<vmem>>, %arg5: memref<1x128xf32, #tpu.memory_space<vmem>>, %arg6: memref<32x128xf32, #tpu.memory_space<vmem>>, %arg7: memref<32x384xf32, #tpu.memory_space<vmem>>, %arg8: memref<32x384xf32, #tpu.memory_space<vmem>>, %arg9: memref<8x128xf32, #tpu.memory_space<vmem>>) attributes {dimension_semantics = [#tpu.dimension_semantics<parallel>], iteration_bounds = array<i64: 4>, scalar_prefetch = 0 : i64, scratch_operands = 0 : i64, tpu.core_type = #tpu.core_type<tc>, window_params = [{transform_indices = @transform_0, window_bounds = array<i64: 32, 128>}, {transform_indices = @transform_1, window_bounds = array<i64: 32, 128>}, {transform_indices = @transform_2, window_bounds = array<i64: 32, 128>}, {pipeline_mode = #tpu.pipeline_mode<synchronous>, transform_indices = @transform_3, window_bounds = array<i64: 1, 128>}, {pipeline_mode = #tpu.pipeline_mode<synchronous>, transform_indices = @transform_4, window_bounds = array<i64: 1, 128>}, {transform_indices = @transform_5, window_bounds = array<i64: 32, 128>}, {transform_indices = @transform_6, window_bounds = array<i64: 32, 384>}, {transform_indices = @transform_7, window_bounds = array<i64: 32, 384>}, {transform_indices = @transform_8, window_bounds = array<i64: 8, 128>}]} {
    %c0 = arith.constant 0 : index
    %c0_0 = arith.constant 0 : index
    %0 = vector.load %arg1[%c0, %c0_0] : memref<32x128xf32, #tpu.memory_space<vmem>>, vector<32x128xf32>
    %c0_1 = arith.constant 0 : index
    %c0_2 = arith.constant 0 : index
    %1 = vector.load %arg2[%c0_1, %c0_2] : memref<32x128xf32, #tpu.memory_space<vmem>>, vector<32x128xf32>
    %c0_3 = arith.constant 0 : index
    %c0_4 = arith.constant 0 : index
    %2 = vector.load %arg3[%c0_3, %c0_4] : memref<32x128xf32, #tpu.memory_space<vmem>>, vector<32x128xf32>
    %c0_5 = arith.constant 0 : index
    %c0_6 = arith.constant 0 : index
    %3 = vector.load %arg4[%c0_5, %c0_6] : memref<1x128xf32, #tpu.memory_space<vmem>>, vector<1x128xf32>
    %c0_7 = arith.constant 0 : index
    %c0_8 = arith.constant 0 : index
    %4 = vector.load %arg5[%c0_7, %c0_8] : memref<1x128xf32, #tpu.memory_space<vmem>>, vector<1x128xf32>
    %c0_9 = arith.constant 0 : index
    %c0_10 = arith.constant 0 : index
    %5 = vector.load %arg6[%c0_9, %c0_10] : memref<32x128xf32, #tpu.memory_space<vmem>>, vector<32x128xf32>
    %6 = vector.broadcast %4 : vector<1x128xf32> to vector<32x128xf32>
    %7 = arith.subf %0, %6 : vector<32x128xf32>
    %cst = arith.constant 0.000000e+00 : f32
    %8 = vector.broadcast %cst : f32 to vector<32x128xf32>
    %9 = arith.maximumf %7, %8 : vector<32x128xf32>
    %10 = vector.broadcast %3 : vector<1x128xf32> to vector<32x128xf32>
    %11 = arith.subf %10, %0 : vector<32x128xf32>
    %cst_11 = arith.constant 0.000000e+00 : f32
    %12 = vector.broadcast %cst_11 : f32 to vector<32x128xf32>
    %13 = arith.maximumf %11, %12 : vector<32x128xf32>
    %14 = arith.subf %0, %5 : vector<32x128xf32>
    %15 = math.absf %14 : vector<32x128xf32>
    %c0_12 = arith.constant 0 : index
    %c0_13 = arith.constant 0 : index
    %16 = vector.load %arg7[%c0_12, %c0_13] : memref<32x384xf32, #tpu.memory_space<vmem>>, vector<32x128xf32>
    tpu.vector_store %arg7[%c0_12, %c0_13], %7 {strides = array<i32>} : memref<32x384xf32, #tpu.memory_space<vmem>>, vector<32x128xf32>,
    %c0_14 = arith.constant 0 : index
    %c128 = arith.constant 128 : index
    %17 = vector.load %arg7[%c0_14, %c128] : memref<32x384xf32, #tpu.memory_space<vmem>>, vector<32x128xf32>
    tpu.vector_store %arg7[%c0_14, %c128], %11 {strides = array<i32>} : memref<32x384xf32, #tpu.memory_space<vmem>>, vector<32x128xf32>,
    %c0_15 = arith.constant 0 : index
    %c256 = arith.constant 256 : index
    %18 = vector.load %arg7[%c0_15, %c256] : memref<32x384xf32, #tpu.memory_space<vmem>>, vector<32x128xf32>
    tpu.vector_store %arg7[%c0_15, %c256], %14 {strides = array<i32>} : memref<32x384xf32, #tpu.memory_space<vmem>>, vector<32x128xf32>,
    %c0_16 = arith.constant 0 : index
    %c0_17 = arith.constant 0 : index
    %19 = vector.load %arg8[%c0_16, %c0_17] : memref<32x384xf32, #tpu.memory_space<vmem>>, vector<32x128xf32>
    tpu.vector_store %arg8[%c0_16, %c0_17], %9 {strides = array<i32>} : memref<32x384xf32, #tpu.memory_space<vmem>>, vector<32x128xf32>,
    %c0_18 = arith.constant 0 : index
    %c128_19 = arith.constant 128 : index
    %20 = vector.load %arg8[%c0_18, %c128_19] : memref<32x384xf32, #tpu.memory_space<vmem>>, vector<32x128xf32>
    tpu.vector_store %arg8[%c0_18, %c128_19], %13 {strides = array<i32>} : memref<32x384xf32, #tpu.memory_space<vmem>>, vector<32x128xf32>,
    %c0_20 = arith.constant 0 : index
    %c256_21 = arith.constant 256 : index
    %21 = vector.load %arg8[%c0_20, %c256_21] : memref<32x384xf32, #tpu.memory_space<vmem>>, vector<32x128xf32>
    tpu.vector_store %arg8[%c0_20, %c256_21], %15 {strides = array<i32>} : memref<32x384xf32, #tpu.memory_space<vmem>>, vector<32x128xf32>,
    %22 = arith.subf %1, %2 : vector<32x128xf32>
    %23 = arith.subf %1, %2 : vector<32x128xf32>
    %24 = arith.mulf %22, %23 : vector<32x128xf32>
    %25 = arith.mulf %0, %0 : vector<32x128xf32>
    %26 = tpu.iota {dimensions = array<i32: 0>} : vector<32x128xi32>
    %c32_i32 = arith.constant 32 : i32
    %27 = arith.muli %arg0, %c32_i32 : i32
    %c100_i32 = arith.constant 100 : i32
    %28 = arith.subi %c100_i32, %27 : i32
    %29 = vector.broadcast %28 : i32 to vector<32x128xi32>
    %30 = arith.cmpi slt, %26, %29 : vector<32x128xi32>
    %cst_22 = arith.constant 0.000000e+00 : f32
    %31 = vector.broadcast %cst_22 : f32 to vector<32x128xf32>
    %32 = arith.select %30, %24, %31 : vector<32x128xi1>, vector<32x128xf32>
    %33 = arith.select %30, %25, %31 : vector<32x128xi1>, vector<32x128xf32>
    %34 = arith.select %30, %9, %31 : vector<32x128xi1>, vector<32x128xf32>
    %35 = arith.select %30, %13, %31 : vector<32x128xi1>, vector<32x128xf32>
    %36 = arith.select %30, %15, %31 : vector<32x128xi1>, vector<32x128xf32>
    %cst_23 = arith.constant dense<0.000000e+00> : vector<128xf32>
    %37 = vector.multi_reduction <add>, %32, %cst_23 [0] : vector<32x128xf32> to vector<128xf32>
    %38 = vector.shape_cast %37 : vector<128xf32> to vector<1x128xf32>
    %c0_24 = arith.constant 0 : index
    %c0_25 = arith.constant 0 : index
    %39 = vector.load %arg9[%c0_24, %c0_25] : memref<8x128xf32, #tpu.memory_space<vmem>>, vector<1x128xf32>
    tpu.vector_store %arg9[%c0_24, %c0_25], %38 {strides = array<i32>} : memref<8x128xf32, #tpu.memory_space<vmem>>, vector<1x128xf32>,
    %cst_26 = arith.constant dense<0.000000e+00> : vector<128xf32>
    %40 = vector.multi_reduction <add>, %33, %cst_26 [0] : vector<32x128xf32> to vector<128xf32>
    %41 = vector.shape_cast %40 : vector<128xf32> to vector<1x128xf32>
    %c1 = arith.constant 1 : index
    %c0_27 = arith.constant 0 : index
    %42 = vector.load %arg9[%c1, %c0_27] : memref<8x128xf32, #tpu.memory_space<vmem>>, vector<1x128xf32>
    tpu.vector_store %arg9[%c1, %c0_27], %41 {strides = array<i32>} : memref<8x128xf32, #tpu.memory_space<vmem>>, vector<1x128xf32>,
    %cst_28 = arith.constant dense<0.000000e+00> : vector<128xf32>
    %43 = vector.multi_reduction <add>, %34, %cst_28 [0] : vector<32x128xf32> to vector<128xf32>
    %44 = vector.shape_cast %43 : vector<128xf32> to vector<1x128xf32>
    %c2 = arith.constant 2 : index
    %c0_29 = arith.constant 0 : index
    %45 = vector.load %arg9[%c2, %c0_29] : memref<8x128xf32, #tpu.memory_space<vmem>>, vector<1x128xf32>
    tpu.vector_store %arg9[%c2, %c0_29], %44 {strides = array<i32>} : memref<8x128xf32, #tpu.memory_space<vmem>>, vector<1x128xf32>,
    %cst_30 = arith.constant dense<0.000000e+00> : vector<128xf32>
    %46 = vector.multi_reduction <add>, %35, %cst_30 [0] : vector<32x128xf32> to vector<128xf32>
    %47 = vector.shape_cast %46 : vector<128xf32> to vector<1x128xf32>
    %c3 = arith.constant 3 : index
    %c0_31 = arith.constant 0 : index
    %48 = vector.load %arg9[%c3, %c0_31] : memref<8x128xf32, #tpu.memory_space<vmem>>, vector<1x128xf32>
    tpu.vector_store %arg9[%c3, %c0_31], %47 {strides = array<i32>} : memref<8x128xf32, #tpu.memory_space<vmem>>, vector<1x128xf32>,
    %cst_32 = arith.constant dense<0.000000e+00> : vector<128xf32>
    %49 = vector.multi_reduction <add>, %36, %cst_32 [0] : vector<32x128xf32> to vector<128xf32>
    %50 = vector.shape_cast %49 : vector<128xf32> to vector<1x128xf32>
    %c4 = arith.constant 4 : index
    %c0_33 = arith.constant 0 : index
    %51 = vector.load %arg9[%c4, %c0_33] : memref<8x128xf32, #tpu.memory_space<vmem>>, vector<1x128xf32>
    tpu.vector_store %arg9[%c4, %c0_33], %50 {strides = array<i32>} : memref<8x128xf32, #tpu.memory_space<vmem>>, vector<1x128xf32>,
    %cst_34 = arith.constant 0.000000e+00 : f32
    %52 = vector.broadcast %cst_34 : f32 to vector<3x128xf32>
    %c5 = arith.constant 5 : index
    %c0_35 = arith.constant 0 : index
    %53 = vector.load %arg9[%c5, %c0_35] : memref<8x128xf32, #tpu.memory_space<vmem>>, vector<3x128xf32>
    tpu.vector_store %arg9[%c5, %c0_35], %52 {strides = array<i32>} : memref<8x128xf32, #tpu.memory_space<vmem>>, vector<3x128xf32>,
    return
  }
  func.func @transform_0(%arg0: i32) -> (i32, i32) {
    %c0_i32 = arith.constant 0 : i32
    %c0_i32_0 = arith.constant 0 : i32
    return %arg0, %c0_i32 : i32, i32
  }
  func.func @transform_1(%arg0: i32) -> (i32, i32) {
    %c0_i32 = arith.constant 0 : i32
    %c0_i32_0 = arith.constant 0 : i32
    return %arg0, %c0_i32 : i32, i32
  }
  func.func @transform_2(%arg0: i32) -> (i32, i32) {
    %c0_i32 = arith.constant 0 : i32
    %c0_i32_0 = arith.constant 0 : i32
    return %arg0, %c0_i32 : i32, i32
  }
  func.func @transform_3(%arg0: i32) -> (i32, i32) {
    %c0_i32 = arith.constant 0 : i32
    %c0_i32_0 = arith.constant 0 : i32
    %c0_i32_1 = arith.constant 0 : i32
    return %c0_i32, %c0_i32_0 : i32, i32
  }
  func.func @transform_4(%arg0: i32) -> (i32, i32) {
    %c0_i32 = arith.constant 0 : i32
    %c0_i32_0 = arith.constant 0 : i32
    %c0_i32_1 = arith.constant 0 : i32
    return %c0_i32, %c0_i32_0 : i32, i32
  }
  func.func @transform_5(%arg0: i32) -> (i32, i32) {
    %c0_i32 = arith.constant 0 : i32
    %c0_i32_0 = arith.constant 0 : i32
    return %arg0, %c0_i32 : i32, i32
  }
  func.func @transform_6(%arg0: i32) -> (i32, i32) {
    %c0_i32 = arith.constant 0 : i32
    %c0_i32_0 = arith.constant 0 : i32
    return %arg0, %c0_i32 : i32, i32
  }
  func.func @transform_7(%arg0: i32) -> (i32, i32) {
    %c0_i32 = arith.constant 0 : i32
    %c0_i32_0 = arith.constant 0 : i32
    return %arg0, %c0_i32 : i32, i32
  }
  func.func @transform_8(%arg0: i32) -> (i32, i32) {
    %c0_i32 = arith.constant 0 : i32
    %c0_i32_0 = arith.constant 0 : i32
    return %arg0, %c0_i32 : i32, i32
  }
}

</mosaic_0001>

<llo_original>
// kernel: aggregate_loss.1
$region0: #{aggregate_loss.1}
  #allocation0 [shape = 'u32[]', space=smem, size = 0x4, offset = 0x4, fixed_abs, tag = 'smem constant byte address 0x4 - core index']
  #allocation1 [shape = 'u32[144,128]{1,0:T(1,128)}', space=vmem, size = 0x12000, scoped, tag = 'internal scratch']
  %s0 = inlined_call_operand.hbm [shape: f32[100,128], index: 0, kind: input, shape index: {}]
  %s1 = inlined_call_operand.hbm [shape: f32[100,128], index: 1, kind: input, shape index: {}]
  %s2 = inlined_call_operand.hbm [shape: f32[100,128], index: 2, kind: input, shape index: {}]
  %s3 = inlined_call_operand.vmem [shape: f32[1,128], index: 3, kind: input, shape index: {}]
  %s4 = inlined_call_operand.vmem [shape: f32[1,128], index: 4, kind: input, shape index: {}]
  %s5 = inlined_call_operand.hbm [shape: f32[100,128], index: 5, kind: input, shape index: {}]
  %s6 = inlined_call_operand.vmem [shape: f32[100,384], index: 6, kind: output, shape index: {0}]
  %s7 = inlined_call_operand.vmem [shape: f32[100,384], index: 7, kind: output, shape index: {1}]
  %s8 = inlined_call_operand.vmem [shape: f32[32,128], index: 8, kind: output, shape index: {2}]
  %9 = xla_tuple %s6, %s7, %s8
  %s10 = sld [smem:[#allocation0]]
  $region141: #{aggregate_loss.1} parent=0
    _
  %s12 = ssub.s32 1, %s10
  %s13 = scalar_select 0, %s12, %s10
  $region1: #{aggregate_loss.1} parent=0
    #allocation2 [shape = 'u8[32768]{0}', space=vmem, size = 0x8000, scoped, tag = 'input window, operand 0']
    #allocation3 [shape = 's32[2]{0}', space=sflag, size = 0x8, scoped, tag = 'scoped memory for aggregate_loss.1']
    #allocation4 [shape = 'u8[32768]{0}', space=vmem, size = 0x8000, scoped, tag = 'input window, operand 1']
    #allocation5 [shape = 's32[2]{0}', space=sflag, size = 0x8, scoped, tag = 'scoped memory for aggregate_loss.1']
    #allocation6 [shape = 'u8[32768]{0}', space=vmem, size = 0x8000, scoped, tag = 'input window, operand 2']
    #allocation7 [shape = 'u8[32768]{0}', space=vmem, size = 0x8000, scoped, tag = 'input window, operand 5']
    #allocation8 [shape = 's32[2]{0}', space=sflag, size = 0x8, scoped, tag = 'scoped memory for aggregate_loss.1']
    #allocation9 [shape = 'u8[98304]{0}', space=vmem, size = 0x18000, scoped, tag = 'output window, operand 0']
    #allocation10 [shape = 'u8[98304]{0}', space=vmem, size = 0x18000, scoped, tag = 'output window, operand 1']
    %14 = vsyncpa [#allocation3], 0
    %s15 = scalar_lea.sflag [#allocation3], 1
    %16 = vsyncpa %s15, 0
    %17 = vsyncpa [#allocation5], 0
    %s18 = scalar_lea.sflag [#allocation5], 1
    %19 = vsyncpa %s18, 0
    %20 = vsyncpa [#allocation8], 0
    %s21 = scalar_lea.sflag [#allocation8], 1
    %22 = vsyncpa %s21, 0
    loop: start=0, step=1, limit=6
    $region2: #{aggregate_loss.1} parent=1 // loop_pre_header
      _
    $region3: #{aggregate_loss.1} parent=1 // loop_header
      %s24 = sphi 0, %s28
      %p25 = scmp.ge.s32.totalorder %s24, 6
      %s34 = sphi 0, %s36
      %s37 = sphi 0, %s34
      %s38 = sphi 0, %s37
      %s54 = sphi 0, %s38
      %s60 = sphi 0, %s62
      %s63 = sphi 0, %s60
      %s64 = sphi 0, %s63
      %s80 = sphi 0, %s64
      %s86 = sphi 0, %s88
      %s89 = sphi 0, %s86
      %s90 = sphi 0, %s89
      %s106 = sphi 0, %s90
      %s110 = sphi 0, %s110
      %s112 = sphi 0, %s110
      %s113 = sphi 0, %s112
      %s127 = sphi 0, %s113
      %s131 = sphi 0, %s131
      %s133 = sphi 0, %s131
      %s134 = sphi 0, %s133
      %s148 = sphi 0, %s134
      %s154 = sphi 0, %s156
      %s157 = sphi 0, %s154
      %s158 = sphi 0, %s157
      %s174 = sphi 0, %s158
      %s180 = sphi 0, %s182
      %s183 = sphi 0, %s180
      %s184 = sphi 0, %s183
      %s200 = sphi 0, %s184
      %s206 = sphi 0, %s208
      %s209 = sphi 0, %s206
      %s210 = sphi 0, %s209
      %s226 = sphi 0, %s210
      %s232 = sphi 0, %s234
      %s235 = sphi 0, %s232
      %s236 = sphi 0, %s235
      %s252 = sphi 0, %s236
    $region4: #{aggregate_loss.1} parent=1 // loop_header_branch
      %27 = sbr.rel (%p25) target = $region8
    $region5: #{aggregate_loss.1} parent=1 // loop_body
      %s29 = ssub.s32 %s24, 1
      %s30 = ssub.s32 %s24, 2
      %s31 = sadd.s32 %s24, 1
      %s32 = ssub.s32 %s24, %s31
      %p33 = scmp.eq.s32.totalorder %s32, 0
      %s35 = sadd.s32 %s34, 1
      %s36 = scalar_select %p33, %s34, %s35
      %p39 = pneg %p33
      %p40 = scmp.eq.s32.totalorder %s24, 3
      %p41 = por %p39, %p40
      %p42 = scmp.ne.s32.totalorder %s34, %s37
      %p43 = scmp.eq.s32.totalorder %s24, 0
      %p44 = por %p42, %p43
      %p45 = scmp.ne.s32.totalorder %s34, %s37
      %p46 = scmp.eq.s32.totalorder %s29, 3
      %p47 = por %p45, %p46
      %p48 = scmp.ne.s32.totalorder %s37, %s38
      %p49 = scmp.eq.s32.totalorder %s29, 0
      %p50 = por %p48, %p49
      %p51 = scmp.ne.s32.totalorder %s37, %s38
      %p52 = scmp.eq.s32.totalorder %s30, 3
      %p53 = por %p51, %p52
      %p55 = scmp.ne.s32.totalorder %s38, %s54
      %p56 = scmp.eq.s32.totalorder %s30, 0
      %p57 = por %p55, %p56
      %s58 = ssub.s32 %s24, %s31
      %p59 = scmp.eq.s32.totalorder %s58, 0
      %s61 = sadd.s32 %s60, 1
      %s62 = scalar_select %p59, %s60, %s61
      %p65 = pneg %p59
      %p66 = scmp.eq.s32.totalorder %s24, 3
      %p67 = por %p65, %p66
      %p68 = scmp.ne.s32.totalorder %s60, %s63
      %p69 = scmp.eq.s32.totalorder %s24, 0
      %p70 = por %p68, %p69
      %p71 = scmp.ne.s32.totalorder %s60, %s63
      %p72 = scmp.eq.s32.totalorder %s29, 3
      %p73 = por %p71, %p72
      %p74 = scmp.ne.s32.totalorder %s63, %s64
      %p75 = scmp.eq.s32.totalorder %s29, 0
      %p76 = por %p74, %p75
      %p77 = scmp.ne.s32.totalorder %s63, %s64
      %p78 = scmp.eq.s32.totalorder %s30, 3
      %p79 = por %p77, %p78
      %p81 = scmp.ne.s32.totalorder %s64, %s80
      %p82 = scmp.eq.s32.totalorder %s30, 0
      %p83 = por %p81, %p82
      %s84 = ssub.s32 %s24, %s31
      %p85 = scmp.eq.s32.totalorder %s84, 0
      %s87 = sadd.s32 %s86, 1
      %s88 = scalar_select %p85, %s86, %s87
      %p91 = pneg %p85
      %p92 = scmp.eq.s32.totalorder %s24, 3
      %p93 = por %p91, %p92
      %p94 = scmp.ne.s32.totalorder %s86, %s89
      %p95 = scmp.eq.s32.totalorder %s24, 0
      %p96 = por %p94, %p95
      %p97 = scmp.ne.s32.totalorder %s86, %s89
      %p98 = scmp.eq.s32.totalorder %s29, 3
      %p99 = por %p97, %p98
      %p100 = scmp.ne.s32.totalorder %s89, %s90
      %p101 = scmp.eq.s32.totalorder %s29, 0
      %p102 = por %p100, %p101
      %p103 = scmp.ne.s32.totalorder %s89, %s90
      %p104 = scmp.eq.s32.totalorder %s30, 3
      %p105 = por %p103, %p104
      %p107 = scmp.ne.s32.totalorder %s90, %s106
      %p108 = scmp.eq.s32.totalorder %s30, 0
      %p109 = por %p107, %p108
      %s111 = sadd.s32 %s110, 1
      %p114 = scmp.eq.s32.totalorder %s24, 3
      %p115 = scmp.ne.s32.totalorder %s110, %s112
      %p116 = scmp.eq.s32.totalorder %s24, 0
      %p117 = por %p115, %p116
      %p118 = scmp.ne.s32.totalorder %s110, %s112
      %p119 = scmp.eq.s32.totalorder %s29, 3
      %p120 = por %p118, %p119
      %p121 = scmp.ne.s32.totalorder %s112, %s113
      %p122 = scmp.eq.s32.totalorder %s29, 0
      %p123 = por %p121, %p122
      %p124 = scmp.ne.s32.totalorder %s112, %s113
      %p125 = scmp.eq.s32.totalorder %s30, 3
      %p126 = por %p124, %p125
      %p128 = scmp.ne.s32.totalorder %s113, %s127
      %p129 = scmp.eq.s32.totalorder %s30, 0
      %p130 = por %p128, %p129
      %s132 = sadd.s32 %s131, 1
      %p135 = scmp.eq.s32.totalorder %s24, 3
      %p136 = scmp.ne.s32.totalorder %s131, %s133
      %p137 = scmp.eq.s32.totalorder %s24, 0
      %p138 = por %p136, %p137
      %p139 = scmp.ne.s32.totalorder %s131, %s133
      %p140 = scmp.eq.s32.totalorder %s29, 3
      %p141 = por %p139, %p140
      %p142 = scmp.ne.s32.totalorder %s133, %s134
      %p143 = scmp.eq.s32.totalorder %s29, 0
      %p144 = por %p142, %p143
      %p145 = scmp.ne.s32.totalorder %s133, %s134
      %p146 = scmp.eq.s32.totalorder %s30, 3
      %p147 = por %p145, %p146
      %p149 = scmp.ne.s32.totalorder %s134, %s148
      %p150 = scmp.eq.s32.totalorder %s30, 0
      %p151 = por %p149, %p150
      %s152 = ssub.s32 %s24, %s31
      %p153 = scmp.eq.s32.totalorder %s152, 0
      %s155 = sadd.s32 %s154, 1
      %s156 = scalar_select %p153, %s154, %s155
      %p159 = pneg %p153
      %p160 = scmp.eq.s32.totalorder %s24, 3
      %p161 = por %p159, %p160
      %p162 = scmp.ne.s32.totalorder %s154, %s157
      %p163 = scmp.eq.s32.totalorder %s24, 0
      %p164 = por %p162, %p163
      %p165 = scmp.ne.s32.totalorder %s154, %s157
      %p166 = scmp.eq.s32.totalorder %s29, 3
      %p167 = por %p165, %p166
      %p168 = scmp.ne.s32.totalorder %s157, %s158
      %p169 = scmp.eq.s32.totalorder %s29, 0
      %p170 = por %p168, %p169
      %p171 = scmp.ne.s32.totalorder %s157, %s158
      %p172 = scmp.eq.s32.totalorder %s30, 3
      %p173 = por %p171, %p172
      %p175 = scmp.ne.s32.totalorder %s158, %s174
      %p176 = scmp.eq.s32.totalorder %s30, 0
      %p177 = por %p175, %p176
      %s178 = ssub.s32 %s24, %s31
      %p179 = scmp.eq.s32.totalorder %s178, 0
      %s181 = sadd.s32 %s180, 1
      %s182 = scalar_select %p179, %s180, %s181
      %p185 = pneg %p179
      %p186 = scmp.eq.s32.totalorder %s24, 3
      %p187 = por %p185, %p186
      %p188 = scmp.ne.s32.totalorder %s180, %s183
      %p189 = scmp.eq.s32.totalorder %s24, 0
      %p190 = por %p188, %p189
      %p191 = scmp.ne.s32.totalorder %s180, %s183
      %p192 = scmp.eq.s32.totalorder %s29, 3
      %p193 = por %p191, %p192
      %p194 = scmp.ne.s32.totalorder %s183, %s184
      %p195 = scmp.eq.s32.totalorder %s29, 0
      %p196 = por %p194, %p195
      %p197 = scmp.ne.s32.totalorder %s183, %s184
      %p198 = scmp.eq.s32.totalorder %s30, 3
      %p199 = por %p197, %p198
      %p201 = scmp.ne.s32.totalorder %s184, %s200
      %p202 = scmp.eq.s32.totalorder %s30, 0
      %p203 = por %p201, %p202
      %s204 = ssub.s32 %s24, %s31
      %p205 = scmp.eq.s32.totalorder %s204, 0
      %s207 = sadd.s32 %s206, 1
      %s208 = scalar_select %p205, %s206, %s207
      %p211 = pneg %p205
      %p212 = scmp.eq.s32.totalorder %s24, 3
      %p213 = por %p211, %p212
      %p214 = scmp.ne.s32.totalorder %s206, %s209
      %p215 = scmp.eq.s32.totalorder %s24, 0
      %p216 = por %p214, %p215
      %p217 = scmp.ne.s32.totalorder %s206, %s209
      %p218 = scmp.eq.s32.totalorder %s29, 3
      %p219 = por %p217, %p218
      %p220 = scmp.ne.s32.totalorder %s209, %s210
      %p221 = scmp.eq.s32.totalorder %s29, 0
      %p222 = por %p220, %p221
      %p223 = scmp.ne.s32.totalorder %s209, %s210
      %p224 = scmp.eq.s32.totalorder %s30, 3
      %p225 = por %p223, %p224
      %p227 = scmp.ne.s32.totalorder %s210, %s226
      %p228 = scmp.eq.s32.totalorder %s30, 0
      %p229 = por %p227, %p228
      %s230 = ssub.s32 %s24, %s31
      %p231 = scmp.eq.s32.totalorder %s230, 0
      %s233 = sadd.s32 %s232, 1
      %s234 = scalar_select %p231, %s232, %s233
      %p237 = pneg %p231
      %p238 = scmp.eq.s32.totalorder %s24, 3
      %p239 = por %p237, %p238
      %p240 = scmp.ne.s32.totalorder %s232, %s235
      %p241 = scmp.eq.s32.totalorder %s24, 0
      %p242 = por %p240, %p241
      %p243 = scmp.ne.s32.totalorder %s232, %s235
      %p244 = scmp.eq.s32.totalorder %s29, 3
      %p245 = por %p243, %p244
      %p246 = scmp.ne.s32.totalorder %s235, %s236
      %p247 = scmp.eq.s32.totalorder %s29, 0
      %p248 = por %p246, %p247
      %p249 = scmp.ne.s32.totalorder %s235, %s236
      %p250 = scmp.eq.s32.totalorder %s30, 3
      %p251 = por %p249, %p250
      %p253 = scmp.ne.s32.totalorder %s236, %s252
      %p254 = scmp.eq.s32.totalorder %s30, 0
      %p255 = por %p253, %p254
      %p256 = scmp.le.s32.totalorder 1, %s24
      %p257 = scmp.lt.s32.totalorder %s24, 5
      %p258 = pnand %p256, %p257
      %p259 = pneg %p258
      // Predicated region
      $region9: #{aggregate_loss.1} parent=5 // pred_check
        _
      $region10: #{aggregate_loss.1} parent=5 // pred_check_branch
        %261 = sbr.rel (%p258) target = $region12
      $region11: #{aggregate_loss.1} parent=5 // pred_region
        %s262 = ssub.s32 %s24, 1
        // Predicated region
        $region13: #{aggregate_loss.1} parent=11 // pred_check
          %p263 = pneg %p123
        $region14: #{aggregate_loss.1} parent=11 // pred_check_branch
          %265 = sbr.rel (%p263) target = $region16
        $region15: #{aggregate_loss.1} parent=11 // pred_region
          _
        $region16: #{aggregate_loss.1} parent=11 // pred_fallthru
          _
        // Predicated region
        $region17: #{aggregate_loss.1} parent=11 // pred_check
          %p266 = pneg %p144
        $region18: #{aggregate_loss.1} parent=11 // pred_check_branch
          %268 = sbr.rel (%p266) target = $region20
        $region19: #{aggregate_loss.1} parent=11 // pred_region
          _
        $region20: #{aggregate_loss.1} parent=11 // pred_fallthru
          _
      $region12: #{aggregate_loss.1} parent=5 // pred_fallthru
        _
      %p269 = scmp.lt.s32.totalorder %s24, 4
      // Predicated region
      $region21: #{aggregate_loss.1} parent=5 // pred_check
        %p270 = pneg %p269
      $region22: #{aggregate_loss.1} parent=5 // pred_check_branch
        %272 = sbr.rel (%p270) target = $region24
      $region23: #{aggregate_loss.1} parent=5 // pred_region
        // Predicated region
        $region25: #{aggregate_loss.1} parent=23 // pred_check
          %p273 = pneg %p44
        $region26: #{aggregate_loss.1} parent=23 // pred_check_branch
          %275 = sbr.rel (%p273) target = $region28
        $region27: #{aggregate_loss.1} parent=23 // pred_region
          %s276 = sand.u32 %s34, 1
          %s277 = scalar_lea.sflag [#allocation3], %s276
          %s278 = sand.u32 %s34, 1
          %s279 = smul.addr %s278, 32
          %s280 = scalar_lea.vmem [#allocation2], %s279
          %s281 = smul.u32 4, %s24
          %s282 = ssub.s32 13, %s281
          %p283 = scmp.lt.s32.totalorder %s282, 4
          %s284 = scalar_select %p283, %s282, 4
          %s285 = smul.u32 128, %s284
          %s287 = ssub.s32 512, %s285
          %288 = vsyncadd %s277, %s287
          %p289 = scmp.ne.s32.totalorder 0, %s285
          %s290 = smul.addr %s281, 128
          %s291 = scalar_lea.hbm %s0, %s290
          %s292 = smul.u32 8, %s284
          %s293 = sshll.u32 %s280, 4
          %s294 = int_to_ptr.vmem [resolvable:$true] %s293
          %s295 = sshll.u32 %s292, 4
          %299 = dma.hbm_to_vmem [thread:$0]  (%p289), %s291, %s295, %s294, %s277, 128, 128, 8
        $region28: #{aggregate_loss.1} parent=23 // pred_fallthru
          _
        // Predicated region
        $region29: #{aggregate_loss.1} parent=23 // pred_check
          %p300 = pneg %p70
        $region30: #{aggregate_loss.1} parent=23 // pred_check_branch
          %302 = sbr.rel (%p300) target = $region32
        $region31: #{aggregate_loss.1} parent=23 // pred_region
          %s303 = sand.u32 %s24, 1
          %s304 = scalar_lea.sflag [#allocation5], %s303
          %s305 = sand.u32 %s60, 1
          %s306 = smul.addr %s305, 32
          %s307 = scalar_lea.vmem [#allocation4], %s306
          %s308 = smul.u32 4, %s24
          %s309 = ssub.s32 13, %s308
          %p310 = scmp.lt.s32.totalorder %s309, 4
          %s311 = scalar_select %p310, %s309, 4
          %s312 = smul.u32 128, %s311
          %s314 = ssub.s32 512, %s312
          %315 = vsyncadd %s304, %s314
          %p316 = scmp.ne.s32.totalorder 0, %s312
          %s317 = smul.addr %s308, 128
          %s318 = scalar_lea.hbm %s1, %s317
          %s319 = smul.u32 8, %s311
          %s320 = sshll.u32 %s307, 4
          %s321 = int_to_ptr.vmem [resolvable:$true] %s320
          %s322 = sshll.u32 %s319, 4
          %326 = dma.hbm_to_vmem [thread:$0]  (%p316), %s318, %s322, %s321, %s304, 128, 128, 8
        $region32: #{aggregate_loss.1} parent=23 // pred_fallthru
          _
        // Predicated region
        $region33: #{aggregate_loss.1} parent=23 // pred_check
          %p327 = pneg %p96
        $region34: #{aggregate_loss.1} parent=23 // pred_check_branch
          %329 = sbr.rel (%p327) target = $region36
        $region35: #{aggregate_loss.1} parent=23 // pred_region
          %s330 = sand.u32 %s24, 1
          %s331 = scalar_lea.sflag [#allocation5], %s330
          %s332 = sand.u32 %s86, 1
          %s333 = smul.addr %s332, 32
          %s334 = scalar_lea.vmem [#allocation6], %s333
          %s335 = smul.u32 4, %s24
          %s336 = ssub.s32 13, %s335
          %p337 = scmp.lt.s32.totalorder %s336, 4
          %s338 = scalar_select %p337, %s336, 4
          %s339 = smul.u32 128, %s338
          %s341 = ssub.s32 512, %s339
          %342 = vsyncadd %s331, %s341
          %p343 = scmp.ne.s32.totalorder 0, %s339
          %s344 = smul.addr %s335, 128
          %s345 = scalar_lea.hbm %s2, %s344
          %s346 = smul.u32 8, %s338
          %s347 = sshll.u32 %s334, 4
          %s348 = int_to_ptr.vmem [resolvable:$true] %s347
          %s349 = sshll.u32 %s346, 4
          %353 = dma.hbm_to_vmem [thread:$0]  (%p343), %s345, %s349, %s348, %s331, 128, 128, 8
        $region36: #{aggregate_loss.1} parent=23 // pred_fallthru
          _
        // Predicated region
        $region37: #{aggregate_loss.1} parent=23 // pred_check
          %p354 = pneg %p164
        $region38: #{aggregate_loss.1} parent=23 // pred_check_branch
          %356 = sbr.rel (%p354) target = $region40
        $region39: #{aggregate_loss.1} parent=23 // pred_region
          %s357 = sand.u32 %s154, 1
          %s358 = scalar_lea.sflag [#allocation8], %s357
          %s359 = sand.u32 %s154, 1
          %s360 = smul.addr %s359, 32
          %s361 = scalar_lea.vmem [#allocation7], %s360
          %s362 = smul.u32 4, %s24
          %s363 = ssub.s32 13, %s362
          %p364 = scmp.lt.s32.totalorder %s363, 4
          %s365 = scalar_select %p364, %s363, 4
          %s366 = smul.u32 128, %s365
          %s368 = ssub.s32 512, %s366
          %369 = vsyncadd %s358, %s368
          %p370 = scmp.ne.s32.totalorder 0, %s366
          %s371 = smul.addr %s362, 128
          %s372 = scalar_lea.hbm %s5, %s371
          %s373 = smul.u32 8, %s365
          %s374 = sshll.u32 %s361, 4
          %s375 = int_to_ptr.vmem [resolvable:$true] %s374
          %s376 = sshll.u32 %s373, 4
          %380 = dma.hbm_to_vmem [thread:$0]  (%p370), %s372, %s376, %s375, %s358, 128, 128, 8
        $region40: #{aggregate_loss.1} parent=23 // pred_fallthru
          _
      $region24: #{aggregate_loss.1} parent=5 // pred_fallthru
        _
      %p381 = scmp.le.s32.totalorder 1, %s24
      %p382 = scmp.lt.s32.totalorder %s24, 5
      %p383 = pnand %p381, %p382
      %p384 = pneg %p383
      // Predicated region
      $region41: #{aggregate_loss.1} parent=5 // pred_check
        _
      $region42: #{aggregate_loss.1} parent=5 // pred_check_branch
        %386 = sbr.rel (%p383) target = $region44
      $region43: #{aggregate_loss.1} parent=5 // pred_region
        %s387 = ssub.s32 %s24, 1
        %s388 = sand.u32 %s37, 1
        %s389 = scalar_lea.sflag [#allocation3], %s388
        %s390 = sand.u32 %s37, 1
        %s391 = smul.addr %s390, 32
        %s392 = scalar_lea.vmem [#allocation2], %s391
        // Predicated region
        $region45: #{aggregate_loss.1} parent=43 // pred_check
          %p393 = pneg %p50
        $region46: #{aggregate_loss.1} parent=43 // pred_check_branch
          %395 = sbr.rel (%p393) target = $region48
        $region47: #{aggregate_loss.1} parent=43 // pred_region
          %396 = dma.done %s389, 512
        $region48: #{aggregate_loss.1} parent=43 // pred_fallthru
          _
        %s397 = sand.u32 %s29, 1
        %s398 = scalar_lea.sflag [#allocation5], %s397
        %s399 = sand.u32 %s63, 1
        %s400 = smul.addr %s399, 32
        %s401 = scalar_lea.vmem [#allocation4], %s400
        // Predicated region
        $region49: #{aggregate_loss.1} parent=43 // pred_check
          %p402 = pneg %p76
        $region50: #{aggregate_loss.1} parent=43 // pred_check_branch
          %404 = sbr.rel (%p402) target = $region52
        $region51: #{aggregate_loss.1} parent=43 // pred_region
          %405 = dma.done %s398, 512
        $region52: #{aggregate_loss.1} parent=43 // pred_fallthru
          _
        %s406 = sand.u32 %s29, 1
        %s407 = scalar_lea.sflag [#allocation5], %s406
        %s408 = sand.u32 %s89, 1
        %s409 = smul.addr %s408, 32
        %s410 = scalar_lea.vmem [#allocation6], %s409
        // Predicated region
        $region53: #{aggregate_loss.1} parent=43 // pred_check
          %p411 = pneg %p102
        $region54: #{aggregate_loss.1} parent=43 // pred_check_branch
          %413 = sbr.rel (%p411) target = $region56
        $region55: #{aggregate_loss.1} parent=43 // pred_region
          %414 = dma.done %s407, 512
        $region56: #{aggregate_loss.1} parent=43 // pred_fallthru
          _
        %s415 = sand.u32 %s157, 1
        %s416 = scalar_lea.sflag [#allocation8], %s415
        %s417 = sand.u32 %s157, 1
        %s418 = smul.addr %s417, 32
        %s419 = scalar_lea.vmem [#allocation7], %s418
        // Predicated region
        $region57: #{aggregate_loss.1} parent=43 // pred_check
          %p420 = pneg %p170
        $region58: #{aggregate_loss.1} parent=43 // pred_check_branch
          %422 = sbr.rel (%p420) target = $region60
        $region59: #{aggregate_loss.1} parent=43 // pred_region
          %423 = dma.done %s416, 512
        $region60: #{aggregate_loss.1} parent=43 // pred_fallthru
          _
        %s424 = sand.u32 %s37, 1
        %s425 = scalar_lea.sflag [#allocation3], %s424
        %s426 = sand.u32 %s37, 1
        %s427 = smul.addr %s426, 32
        %s428 = scalar_lea.vmem [#allocation2], %s427
        %p429 = pneg %p50
        %p430 = pneg %p47
        %s431 = sand.u32 %s29, 1
        %s432 = scalar_lea.sflag [#allocation5], %s431
        %s433 = sand.u32 %s63, 1
        %s434 = smul.addr %s433, 32
        %s435 = scalar_lea.vmem [#allocation4], %s434
        %p436 = pneg %p76
        %p437 = pneg %p73
        %s438 = sand.u32 %s29, 1
        %s439 = scalar_lea.sflag [#allocation5], %s438
        %s440 = sand.u32 %s89, 1
        %s441 = smul.addr %s440, 32
        %s442 = scalar_lea.vmem [#allocation6], %s441
        %p443 = pneg %p102
        %p444 = pneg %p99
        %p445 = pneg %p123
        %p446 = pneg %p120
        %p447 = pneg %p144
        %p448 = pneg %p141
        %s449 = sand.u32 %s157, 1
        %s450 = scalar_lea.sflag [#allocation8], %s449
        %s451 = sand.u32 %s157, 1
        %s452 = smul.addr %s451, 32
        %s453 = scalar_lea.vmem [#allocation7], %s452
        %p454 = pneg %p170
        %p455 = pneg %p167
        %p456 = pneg %p196
        %p457 = pneg %p193
        %s458 = sand.u32 %s183, 1
        %s459 = sand.u32 %s183, 1
        %s460 = smul.addr %s459, 96
        %s461 = scalar_lea.vmem [#allocation9], %s460
        %p462 = pneg %p222
        %p463 = pneg %p219
        %s464 = sand.u32 %s209, 1
        %s465 = sand.u32 %s209, 1
        %s466 = smul.addr %s465, 96
        %s467 = scalar_lea.vmem [#allocation10], %s466
        %p468 = pneg %p248
        %p469 = pneg %p245
        %p470 = scmp.lt.s32.totalorder %s29, 3
        %s471 = scalar_select %p470, %s29, 3
        %s472 = smul.addr %s471, 8
        %s473 = scalar_lea.vmem %s8, %s472
        %s474 = smul.u32 4, %s29
        %s475 = ssub.s32 13, %s474
        %p476 = scmp.lt.s32.totalorder %s475, 4
        %s477 = scalar_select %p476, %s475, 4
        %s478 = smul.u32 128, %s477
        %s479 = smul.u32 4, %s29
        %s480 = ssub.s32 13, %s479
        %p481 = scmp.lt.s32.totalorder %s480, 4
        %s482 = scalar_select %p481, %s480, 4
        %s483 = smul.u32 128, %s482
        %s484 = smul.u32 4, %s29
        %s485 = ssub.s32 13, %s484
        %p486 = scmp.lt.s32.totalorder %s485, 4
        %s487 = scalar_select %p486, %s485, 4
        %s488 = smul.u32 128, %s487
        %s489 = smul.u32 4, %s29
        %s490 = ssub.s32 13, %s489
        %p491 = scmp.lt.s32.totalorder %s490, 4
        %s492 = scalar_select %p491, %s490, 4
        %s493 = smul.u32 128, %s492
        %s494 = smul.u32 4, %s29
        %s495 = ssub.s32 13, %s494
        %p496 = scmp.lt.s32.totalorder %s495, 4
        %s497 = scalar_select %p496, %s495, 4
        %s498 = smul.u32 128, %s497
        %s499 = smul.u32 %s498, 3
        %s500 = smul.u32 4, %s29
        %s501 = ssub.s32 13, %s500
        %p502 = scmp.lt.s32.totalorder %s501, 4
        %s503 = scalar_select %p502, %s501, 4
        %s504 = smul.u32 128, %s503
        %s505 = smul.u32 %s504, 3
        %p506 = scmp.lt.s32.totalorder %s29, 3
        %s507 = scalar_select %p506, %s29, 3
        %s508 = smul.addr %s507, 8
        %s509 = scalar_lea.vmem %s8, %s508
        %v510 = vld [vmem:[%s392] sm:$0xff]
        %v511 = vld [vmem:[%s392 + $0x8] sm:$0xff]
        %v512 = vld [vmem:[%s392 + $0x10] sm:$0xff]
        %v513 = vld [vmem:[%s392 + $0x18] sm:$0xff]
        %v514 = vld [vmem:[%s401] sm:$0xff]
        %v515 = vld [vmem:[%s401 + $0x8] sm:$0xff]
        %v516 = vld [vmem:[%s401 + $0x10] sm:$0xff]
        %v517 = vld [vmem:[%s401 + $0x18] sm:$0xff]
        %v518 = vld [vmem:[%s410] sm:$0xff]
        %v519 = vld [vmem:[%s410 + $0x8] sm:$0xff]
        %v520 = vld [vmem:[%s410 + $0x10] sm:$0xff]
        %v521 = vld [vmem:[%s410 + $0x18] sm:$0xff]
        %v522 = vld [vmem:[%s3] sm:$0x1]
        %v523 = vld [vmem:[%s4] sm:$0x1]
        %v524 = vld [vmem:[%s419] sm:$0xff]
        %v525 = vld [vmem:[%s419 + $0x8] sm:$0xff]
        %v526 = vld [vmem:[%s419 + $0x10] sm:$0xff]
        %v527 = vld [vmem:[%s419 + $0x18] sm:$0xff]
        %v529 = vlaneseq
        %v530 = vshrl.u32 %v529, 7
        %v531 = vsub.s32 0, %v530
        %v532 = vrot.slane %v523, %v531
        %v534 = vsub.f32 %v510, %v532
        %v535 = vsub.f32 %v511, %v532
        %v536 = vsub.f32 %v512, %v532
        %v537 = vsub.f32 %v513, %v532
        %v538 = vmax.f32 %v534, 0.0
        %v539 = vmax.f32 %v535, 0.0
        %v540 = vmax.f32 %v536, 0.0
        %v541 = vmax.f32 %v537, 0.0
        %v543 = vlaneseq
        %v544 = vshrl.u32 %v543, 7
        %v545 = vsub.s32 0, %v544
        %v546 = vrot.slane %v522, %v545
        %v548 = vsub.f32 %v546, %v510
        %v549 = vsub.f32 %v546, %v511
        %v550 = vsub.f32 %v546, %v512
        %v551 = vsub.f32 %v546, %v513
        %v552 = vmax.f32 %v548, 0.0
        %v553 = vmax.f32 %v549, 0.0
        %v554 = vmax.f32 %v550, 0.0
        %v555 = vmax.f32 %v551, 0.0
        %v556 = vsub.f32 %v510, %v524
        %v557 = vsub.f32 %v511, %v525
        %v558 = vsub.f32 %v512, %v526
        %v559 = vsub.f32 %v513, %v527
        %v560 = vand.u32 2147483647, %v556
        %v561 = vand.u32 2147483647, %v557
        %v562 = vand.u32 2147483647, %v558
        %v563 = vand.u32 2147483647, %v559
        %564 = vst [vmem:[%s461] sm:$0xff] %v534
        %565 = vst [vmem:[%s461 + $0x18] sm:$0xff] %v535
        %566 = vst [vmem:[%s461 + $0x30] sm:$0xff] %v536
        %567 = vst [vmem:[%s461 + $0x48] sm:$0xff] %v537
        %568 = vst [vmem:[%s461 + $0x8] sm:$0xff] %v548
        %569 = vst [vmem:[%s461 + $0x20] sm:$0xff] %v549
        %570 = vst [vmem:[%s461 + $0x38] sm:$0xff] %v550
        %571 = vst [vmem:[%s461 + $0x50] sm:$0xff] %v551
        %572 = vst [vmem:[%s461 + $0x10] sm:$0xff] %v556
        %573 = vst [vmem:[%s461 + $0x28] sm:$0xff] %v557
        %574 = vst [vmem:[%s461 + $0x40] sm:$0xff] %v558
        %575 = vst [vmem:[%s461 + $0x58] sm:$0xff] %v559
        %576 = vst [vmem:[%s467] sm:$0xff] %v538
        %577 = vst [vmem:[%s467 + $0x18] sm:$0xff] %v539
        %578 = vst [vmem:[%s467 + $0x30] sm:$0xff] %v540
        %579 = vst [vmem:[%s467 + $0x48] sm:$0xff] %v541
        %580 = vst [vmem:[%s467 + $0x8] sm:$0xff] %v552
        %581 = vst [vmem:[%s467 + $0x20] sm:$0xff] %v553
        %582 = vst [vmem:[%s467 + $0x38] sm:$0xff] %v554
        %583 = vst [vmem:[%s467 + $0x50] sm:$0xff] %v555
        %584 = vst [vmem:[%s467 + $0x10] sm:$0xff] %v560
        %585 = vst [vmem:[%s467 + $0x28] sm:$0xff] %v561
        %586 = vst [vmem:[%s467 + $0x40] sm:$0xff] %v562
        %587 = vst [vmem:[%s467 + $0x58] sm:$0xff] %v563
        %v588 = vsub.f32 %v514, %v518
        %v589 = vsub.f32 %v515, %v519
        %v590 = vsub.f32 %v516, %v520
        %v591 = vsub.f32 %v517, %v521
        %v592 = vmul.f32 %v588, %v588
        %v593 = vmul.f32 %v589, %v589
        %v594 = vmul.f32 %v590, %v590
        %v595 = vmul.f32 %v591, %v591
        %v596 = vmul.f32 %v510, %v510
        %v597 = vmul.f32 %v511, %v511
        %v598 = vmul.f32 %v512, %v512
        %v599 = vmul.f32 %v513, %v513
        %v600 = vlaneseq
        %v601 = vshrl.u32 %v600, 7
        %v602 = vadd.s32 %v601, 8
        %v603 = vadd.s32 %v601, 16
        %v604 = vadd.s32 %v601, 24
        %s605 = smul.u32 %s29, 32
        %s606 = ssub.s32 100, %s605
        %v607 = vstv %s606
        %vm608 = vcmp.lt.s32.totalorder %v601, %v607
        %vm609 = vcmp.lt.s32.totalorder %v602, %v607
        %vm610 = vcmp.lt.s32.totalorder %v603, %v607
        %vm611 = vcmp.lt.s32.totalorder %v604, %v607
        %v612 = vsel %vm608, %v592, 0.0
        %v613 = vsel %vm609, %v593, 0.0
        %v614 = vsel %vm610, %v594, 0.0
        %v615 = vsel %vm611, %v595, 0.0
        %v616 = vsel %vm608, %v596, 0.0
        %v617 = vsel %vm609, %v597, 0.0
        %v618 = vsel %vm610, %v598, 0.0
        %v619 = vsel %vm611, %v599, 0.0
        %v620 = vsel %vm608, %v538, 0.0
        %v621 = vsel %vm609, %v539, 0.0
        %v622 = vsel %vm610, %v540, 0.0
        %v623 = vsel %vm611, %v541, 0.0
        %v624 = vsel %vm608, %v552, 0.0
        %v625 = vsel %vm609, %v553, 0.0
        %v626 = vsel %vm610, %v554, 0.0
        %v627 = vsel %vm611, %v555, 0.0
        %v628 = vsel %vm608, %v560, 0.0
        %v629 = vsel %vm609, %v561, 0.0
        %v630 = vsel %vm610, %v562, 0.0
        %v631 = vsel %vm611, %v563, 0.0
        %v632 = vadd.f32 %v612, %v613
        %v633 = vadd.f32 %v632, %v614
        %v634 = vadd.f32 %v633, %v615
        %v635 = vrot.slane %v634, 4
        %v636 = vadd.f32 %v634, %v635
        %v637 = vrot.slane %v636, 2
        %v638 = vadd.f32 %v636, %v637
        %v639 = vrot.slane %v638, 1
        %v640 = vadd.f32 %v638, %v639
        %641 = vst [vmem:[%s509] sm:$0x1] %v640
        %v642 = vadd.f32 %v616, %v617
        %v643 = vadd.f32 %v642, %v618
        %v644 = vadd.f32 %v643, %v619
        %v645 = vrot.slane %v644, 4
        %v646 = vadd.f32 %v644, %v645
        %v647 = vrot.slane %v646, 2
        %v648 = vadd.f32 %v646, %v647
        %v649 = vrot.slane %v648, 1
        %v650 = vadd.f32 %v648, %v649
        %651 = vst [vmem:[%s509 + $0x1] sm:$0x1] %v650
        %v652 = vadd.f32 %v620, %v621
        %v653 = vadd.f32 %v652, %v622
        %v654 = vadd.f32 %v653, %v623
        %v655 = vrot.slane %v654, 4
        %v656 = vadd.f32 %v654, %v655
        %v657 = vrot.slane %v656, 2
        %v658 = vadd.f32 %v656, %v657
        %v659 = vrot.slane %v658, 1
        %v660 = vadd.f32 %v658, %v659
        %661 = vst [vmem:[%s509 + $0x2] sm:$0x1] %v660
        %v662 = vadd.f32 %v624, %v625
        %v663 = vadd.f32 %v662, %v626
        %v664 = vadd.f32 %v663, %v627
        %v665 = vrot.slane %v664, 4
        %v666 = vadd.f32 %v664, %v665
        %v667 = vrot.slane %v666, 2
        %v668 = vadd.f32 %v666, %v667
        %v669 = vrot.slane %v668, 1
        %v670 = vadd.f32 %v668, %v669
        %671 = vst [vmem:[%s509 + $0x3] sm:$0x1] %v670
        %v672 = vadd.f32 %v628, %v629
        %v673 = vadd.f32 %v672, %v630
        %v674 = vadd.f32 %v673, %v631
        %v675 = vrot.slane %v674, 4
        %v676 = vadd.f32 %v674, %v675
        %v677 = vrot.slane %v676, 2
        %v678 = vadd.f32 %v676, %v677
        %v679 = vrot.slane %v678, 1
        %v680 = vadd.f32 %v678, %v679
        %681 = vst [vmem:[%s509 + $0x4] sm:$0x1] %v680
        %682 = vst [vmem:[%s509 + $0x5] sm:$0x7] 0.0
        %s683 = sand.u32 %s183, 1
        %s684 = sand.u32 %s183, 1
        %s685 = smul.addr %s684, 96
        %s686 = scalar_lea.vmem [#allocation9], %s685
        %s687 = sand.u32 %s209, 1
        %s688 = sand.u32 %s209, 1
        %s689 = smul.addr %s688, 96
        %s690 = scalar_lea.vmem [#allocation10], %s689
        %p691 = scmp.lt.s32.totalorder %s29, 3
        %s692 = scalar_select %p691, %s29, 3
        %s693 = smul.addr %s692, 8
        %s694 = scalar_lea.vmem %s8, %s693
        // Predicated region
        $region61: #{aggregate_loss.1} parent=43 // pred_check
          %p695 = pneg %p193
        $region62: #{aggregate_loss.1} parent=43 // pred_check_branch
          %697 = sbr.rel (%p695) target = $region64
        $region63: #{aggregate_loss.1} parent=43 // pred_region
          %s698 = smul.u32 4, %s29
          %s699 = ssub.s32 13, %s698
          %p700 = scmp.lt.s32.totalorder %s699, 4
          %s701 = scalar_select %p700, %s699, 4
          %s702 = smul.u32 128, %s701
          %s703 = smul.u32 %s702, 3
          %p704 = scmp.ne.s32.totalorder 0, %s703
          %s705 = smul.addr %s698, 3
          %s706 = smul.addr %s705, 8
          %s707 = scalar_lea.vmem %s6, %s706
          // Predicated region
          $region65: #{aggregate_loss.1} parent=63 // pred_check
            %p708 = pneg %p704
          $region66: #{aggregate_loss.1} parent=63 // pred_check_branch
            %710 = sbr.rel (%p708) target = $region68
          $region67: #{aggregate_loss.1} parent=63 // pred_region
            // Predicated region
            $region69: #{aggregate_loss.1} parent=67 // pred_check
              _
            $region70: #{aggregate_loss.1} parent=67 // pred_check_branch
              %712 = sbr.rel (0) target = $region72
            $region71: #{aggregate_loss.1} parent=67 // pred_region
              %s713 = sshrl.u32 %s701, 2
              // While loop
              $region73: #{aggregate_loss.1} parent=71 // loop_pre_header
                _
              $region74: #{aggregate_loss.1} parent=71 // loop_header
                %s715 = sphi 0, %s717
                %p716 = scmp.ge.s32.totalorder %s715, %s713
                %s720 = sphi 0, %s749
                %s721 = sphi %s686, %s752
                %s722 = sphi %s707, %s753
              $region75: #{aggregate_loss.1} parent=71 // loop_header_branch
                %719 = sbr.rel (%p716) target = $region79
              $region76: #{aggregate_loss.1} parent=71 // loop_body
                %v723 = vld [vmem:[%s721] sm:$0xff]
                %724 = vst [vmem:[%s722] sm:$0xff] %v723
                %v725 = vld [vmem:[%s721 + $0x18] sm:$0xff]
                %726 = vst [vmem:[%s722 + $0x18] sm:$0xff] %v725
                %v727 = vld [vmem:[%s721 + $0x30] sm:$0xff]
                %728 = vst [vmem:[%s722 + $0x30] sm:$0xff] %v727
                %v729 = vld [vmem:[%s721 + $0x48] sm:$0xff]
                %730 = vst [vmem:[%s722 + $0x48] sm:$0xff] %v729
                %v731 = vld [vmem:[%s721 + $0x8] sm:$0xff]
                %732 = vst [vmem:[%s722 + $0x8] sm:$0xff] %v731
                %v733 = vld [vmem:[%s721 + $0x20] sm:$0xff]
                %734 = vst [vmem:[%s722 + $0x20] sm:$0xff] %v733
                %v735 = vld [vmem:[%s721 + $0x38] sm:$0xff]
                %736 = vst [vmem:[%s722 + $0x38] sm:$0xff] %v735
                %v737 = vld [vmem:[%s721 + $0x50] sm:$0xff]
                %738 = vst [vmem:[%s722 + $0x50] sm:$0xff] %v737
                %v739 = vld [vmem:[%s721 + $0x10] sm:$0xff]
                %740 = vst [vmem:[%s722 + $0x10] sm:$0xff] %v739
                %v741 = vld [vmem:[%s721 + $0x28] sm:$0xff]
                %742 = vst [vmem:[%s722 + $0x28] sm:$0xff] %v741
                %v743 = vld [vmem:[%s721 + $0x40] sm:$0xff]
                %744 = vst [vmem:[%s722 + $0x40] sm:$0xff] %v743
                %v745 = vld [vmem:[%s721 + $0x58] sm:$0xff]
                %746 = vst [vmem:[%s722 + $0x58] sm:$0xff] %v745
                %s747 = sadd.s32 1, %s720
                %p748 = scmp.ge.s32.totalorder %s747, %s713
                %s749 = scalar_select %p748, 0, %s747
                %s750 = smul.u32 %s749, 96
                %s751 = smul.u32 %s749, 96
                %s752 = scalar_lea.vmem %s686, %s750 [#allocation9]
                %s753 = scalar_lea.vmem %s707, %s751
              $region77: #{aggregate_loss.1} parent=71 // loop_footer
                %s717 = sadd.s32 %s715, 1
              $region78: #{aggregate_loss.1} parent=71 // loop_footer_branch
                %714 = sbr.rel target = $region74
              $region79: #{aggregate_loss.1} parent=71 // loop_exit
                _
              %s754 = sshrl.u32 %s701, 2
              %s755 = sand.u32 %s701, 3
              %s756 = smul.u32 %s754, 4
              %s757 = smul.u32 24, %s756
              %s758 = scalar_lea.vmem %s686, %s757 [#allocation9]
              %s759 = smul.u32 24, %s756
              %s760 = scalar_lea.vmem %s707, %s759
              // While loop
              $region80: #{aggregate_loss.1} parent=71 // loop_pre_header
                _
              $region81: #{aggregate_loss.1} parent=71 // loop_header
                %s762 = sphi 0, %s764
                %p763 = scmp.ge.s32.totalorder %s762, %s755
                %s767 = sphi 0, %s778
                %s768 = sphi %s758, %s781
                %s769 = sphi %s760, %s782
              $region82: #{aggregate_loss.1} parent=71 // loop_header_branch
                %766 = sbr.rel (%p763) target = $region86
              $region83: #{aggregate_loss.1} parent=71 // loop_body
                %v770 = vld [vmem:[%s768] sm:$0xff]
                %771 = vst [vmem:[%s769] sm:$0xff] %v770
                %v772 = vld [vmem:[%s768 + $0x8] sm:$0xff]
                %773 = vst [vmem:[%s769 + $0x8] sm:$0xff] %v772
                %v774 = vld [vmem:[%s768 + $0x10] sm:$0xff]
                %775 = vst [vmem:[%s769 + $0x10] sm:$0xff] %v774
                %s776 = sadd.s32 1, %s767
                %p777 = scmp.ge.s32.totalorder %s776, %s755
                %s778 = scalar_select %p777, 0, %s776
                %s779 = smul.u32 %s778, 24
                %s780 = smul.u32 %s778, 24
                %s781 = scalar_lea.vmem %s758, %s779 [#allocation9]
                %s782 = scalar_lea.vmem %s760, %s780
              $region84: #{aggregate_loss.1} parent=71 // loop_footer
                %s764 = sadd.s32 %s762, 1
              $region85: #{aggregate_loss.1} parent=71 // loop_footer_branch
                %761 = sbr.rel target = $region81
              $region86: #{aggregate_loss.1} parent=71 // loop_exit
                _
            $region72: #{aggregate_loss.1} parent=67 // pred_fallthru
              _
            // Predicated region
            $region87: #{aggregate_loss.1} parent=67 // pred_check
              _
            $region88: #{aggregate_loss.1} parent=67 // pred_check_branch
              %784 = sbr.rel target = $region90
            $region89: #{aggregate_loss.1} parent=67 // pred_region
              _
            $region90: #{aggregate_loss.1} parent=67 // pred_fallthru
              _
          $region68: #{aggregate_loss.1} parent=63 // pred_fallthru
            _
          %785 = vnop
        $region64: #{aggregate_loss.1} parent=43 // pred_fallthru
          _
        // Predicated region
        $region91: #{aggregate_loss.1} parent=43 // pred_check
          %p786 = pneg %p219
        $region92: #{aggregate_loss.1} parent=43 // pred_check_branch
          %788 = sbr.rel (%p786) target = $region94
        $region93: #{aggregate_loss.1} parent=43 // pred_region
          %s789 = smul.u32 4, %s29
          %s790 = ssub.s32 13, %s789
          %p791 = scmp.lt.s32.totalorder %s790, 4
          %s792 = scalar_select %p791, %s790, 4
          %s793 = smul.u32 128, %s792
          %s794 = smul.u32 %s793, 3
          %p795 = scmp.ne.s32.totalorder 0, %s794
          %s796 = smul.addr %s789, 3
          %s797 = smul.addr %s796, 8
          %s798 = scalar_lea.vmem %s7, %s797
          // Predicated region
          $region95: #{aggregate_loss.1} parent=93 // pred_check
            %p799 = pneg %p795
          $region96: #{aggregate_loss.1} parent=93 // pred_check_branch
            %801 = sbr.rel (%p799) target = $region98
          $region97: #{aggregate_loss.1} parent=93 // pred_region
            // Predicated region
            $region99: #{aggregate_loss.1} parent=97 // pred_check
              _
            $region100: #{aggregate_loss.1} parent=97 // pred_check_branch
              %803 = sbr.rel (0) target = $region102
            $region101: #{aggregate_loss.1} parent=97 // pred_region
              %s804 = sshrl.u32 %s792, 2
              // While loop
              $region103: #{aggregate_loss.1} parent=101 // loop_pre_header
                _
              $region104: #{aggregate_loss.1} parent=101 // loop_header
                %s806 = sphi 0, %s808
                %p807 = scmp.ge.s32.totalorder %s806, %s804
                %s811 = sphi 0, %s840
                %s812 = sphi %s690, %s843
                %s813 = sphi %s798, %s844
              $region105: #{aggregate_loss.1} parent=101 // loop_header_branch
                %810 = sbr.rel (%p807) target = $region109
              $region106: #{aggregate_loss.1} parent=101 // loop_body
                %v814 = vld [vmem:[%s812] sm:$0xff]
                %815 = vst [vmem:[%s813] sm:$0xff] %v814
                %v816 = vld [vmem:[%s812 + $0x18] sm:$0xff]
                %817 = vst [vmem:[%s813 + $0x18] sm:$0xff] %v816
                %v818 = vld [vmem:[%s812 + $0x30] sm:$0xff]
                %819 = vst [vmem:[%s813 + $0x30] sm:$0xff] %v818
                %v820 = vld [vmem:[%s812 + $0x48] sm:$0xff]
                %821 = vst [vmem:[%s813 + $0x48] sm:$0xff] %v820
                %v822 = vld [vmem:[%s812 + $0x8] sm:$0xff]
                %823 = vst [vmem:[%s813 + $0x8] sm:$0xff] %v822
                %v824 = vld [vmem:[%s812 + $0x20] sm:$0xff]
                %825 = vst [vmem:[%s813 + $0x20] sm:$0xff] %v824
                %v826 = vld [vmem:[%s812 + $0x38] sm:$0xff]
                %827 = vst [vmem:[%s813 + $0x38] sm:$0xff] %v826
                %v828 = vld [vmem:[%s812 + $0x50] sm:$0xff]
                %829 = vst [vmem:[%s813 + $0x50] sm:$0xff] %v828
                %v830 = vld [vmem:[%s812 + $0x10] sm:$0xff]
                %831 = vst [vmem:[%s813 + $0x10] sm:$0xff] %v830
                %v832 = vld [vmem:[%s812 + $0x28] sm:$0xff]
                %833 = vst [vmem:[%s813 + $0x28] sm:$0xff] %v832
                %v834 = vld [vmem:[%s812 + $0x40] sm:$0xff]
                %835 = vst [vmem:[%s813 + $0x40] sm:$0xff] %v834
                %v836 = vld [vmem:[%s812 + $0x58] sm:$0xff]
                %837 = vst [vmem:[%s813 + $0x58] sm:$0xff] %v836
                %s838 = sadd.s32 1, %s811
                %p839 = scmp.ge.s32.totalorder %s838, %s804
                %s840 = scalar_select %p839, 0, %s838
                %s841 = smul.u32 %s840, 96
                %s842 = smul.u32 %s840, 96
                %s843 = scalar_lea.vmem %s690, %s841 [#allocation10]
                %s844 = scalar_lea.vmem %s798, %s842
              $region107: #{aggregate_loss.1} parent=101 // loop_footer
                %s808 = sadd.s32 %s806, 1
              $region108: #{aggregate_loss.1} parent=101 // loop_footer_branch
                %805 = sbr.rel target = $region104
              $region109: #{aggregate_loss.1} parent=101 // loop_exit
                _
              %s845 = sshrl.u32 %s792, 2
              %s846 = sand.u32 %s792, 3
              %s847 = smul.u32 %s845, 4
              %s848 = smul.u32 24, %s847
              %s849 = scalar_lea.vmem %s690, %s848 [#allocation10]
              %s850 = smul.u32 24, %s847
              %s851 = scalar_lea.vmem %s798, %s850
              // While loop
              $region110: #{aggregate_loss.1} parent=101 // loop_pre_header
                _
              $region111: #{aggregate_loss.1} parent=101 // loop_header
                %s853 = sphi 0, %s855
                %p854 = scmp.ge.s32.totalorder %s853, %s846
                %s858 = sphi 0, %s869
                %s859 = sphi %s849, %s872
                %s860 = sphi %s851, %s873
              $region112: #{aggregate_loss.1} parent=101 // loop_header_branch
                %857 = sbr.rel (%p854) target = $region116
              $region113: #{aggregate_loss.1} parent=101 // loop_body
                %v861 = vld [vmem:[%s859] sm:$0xff]
                %862 = vst [vmem:[%s860] sm:$0xff] %v861
                %v863 = vld [vmem:[%s859 + $0x8] sm:$0xff]
                %864 = vst [vmem:[%s860 + $0x8] sm:$0xff] %v863
                %v865 = vld [vmem:[%s859 + $0x10] sm:$0xff]
                %866 = vst [vmem:[%s860 + $0x10] sm:$0xff] %v865
                %s867 = sadd.s32 1, %s858
                %p868 = scmp.ge.s32.totalorder %s867, %s846
                %s869 = scalar_select %p868, 0, %s867
                %s870 = smul.u32 %s869, 24
                %s871 = smul.u32 %s869, 24
                %s872 = scalar_lea.vmem %s849, %s870 [#allocation10]
                %s873 = scalar_lea.vmem %s851, %s871
              $region114: #{aggregate_loss.1} parent=101 // loop_footer
                %s855 = sadd.s32 %s853, 1
              $region115: #{aggregate_loss.1} parent=101 // loop_footer_branch
                %852 = sbr.rel target = $region111
              $region116: #{aggregate_loss.1} parent=101 // loop_exit
                _
            $region102: #{aggregate_loss.1} parent=97 // pred_fallthru
              _
            // Predicated region
            $region117: #{aggregate_loss.1} parent=97 // pred_check
              _
            $region118: #{aggregate_loss.1} parent=97 // pred_check_branch
              %875 = sbr.rel target = $region120
            $region119: #{aggregate_loss.1} parent=97 // pred_region
              _
            $region120: #{aggregate_loss.1} parent=97 // pred_fallthru
              _
          $region98: #{aggregate_loss.1} parent=93 // pred_fallthru
            _
          %876 = vnop
        $region94: #{aggregate_loss.1} parent=43 // pred_fallthru
          _
        // Predicated region
        $region121: #{aggregate_loss.1} parent=43 // pred_check
          %p877 = pneg %p245
        $region122: #{aggregate_loss.1} parent=43 // pred_check_branch
          %879 = sbr.rel (%p877) target = $region124
        $region123: #{aggregate_loss.1} parent=43 // pred_region
          _
        $region124: #{aggregate_loss.1} parent=43 // pred_fallthru
          _
      $region44: #{aggregate_loss.1} parent=5 // pred_fallthru
        _
      %p880 = scmp.le.s32.totalorder 2, %s24
      // Predicated region
      $region125: #{aggregate_loss.1} parent=5 // pred_check
        %p881 = pneg %p880
      $region126: #{aggregate_loss.1} parent=5 // pred_check_branch
        %883 = sbr.rel (%p881) target = $region128
      $region127: #{aggregate_loss.1} parent=5 // pred_region
        %s884 = ssub.s32 %s24, 2
        // Predicated region
        $region129: #{aggregate_loss.1} parent=127 // pred_check
          %p885 = pneg %p199
        $region130: #{aggregate_loss.1} parent=127 // pred_check_branch
          %887 = sbr.rel (%p885) target = $region132
        $region131: #{aggregate_loss.1} parent=127 // pred_region
          %s888 = sand.u32 %s184, 1
          %s889 = sand.u32 %s184, 1
          %s890 = smul.addr %s889, 96
          %s891 = scalar_lea.vmem [#allocation9], %s890
        $region132: #{aggregate_loss.1} parent=127 // pred_fallthru
          _
        // Predicated region
        $region133: #{aggregate_loss.1} parent=127 // pred_check
          %p892 = pneg %p225
        $region134: #{aggregate_loss.1} parent=127 // pred_check_branch
          %894 = sbr.rel (%p892) target = $region136
        $region135: #{aggregate_loss.1} parent=127 // pred_region
          %s895 = sand.u32 %s210, 1
          %s896 = sand.u32 %s210, 1
          %s897 = smul.addr %s896, 96
          %s898 = scalar_lea.vmem [#allocation10], %s897
        $region136: #{aggregate_loss.1} parent=127 // pred_fallthru
          _
        // Predicated region
        $region137: #{aggregate_loss.1} parent=127 // pred_check
          %p899 = pneg %p251
        $region138: #{aggregate_loss.1} parent=127 // pred_check_branch
          %901 = sbr.rel (%p899) target = $region140
        $region139: #{aggregate_loss.1} parent=127 // pred_region
          %p902 = scmp.lt.s32.totalorder %s30, 3
          %s903 = scalar_select %p902, %s30, 3
          %s904 = smul.addr %s903, 8
          %s905 = scalar_lea.vmem %s8, %s904
        $region140: #{aggregate_loss.1} parent=127 // pred_fallthru
          _
      $region128: #{aggregate_loss.1} parent=5 // pred_fallthru
        _
    $region6: #{aggregate_loss.1} parent=1 // loop_footer
      %s28 = sadd.s32 1, %s24
    $region7: #{aggregate_loss.1} parent=1 // loop_footer_branch
      %23 = sbr.rel target = $region3
    $region8: #{aggregate_loss.1} parent=1 // loop_exit
      _
    %906 = vsyncpa [#allocation3], 1
    %s907 = scalar_lea.sflag [#allocation3], 1
    %908 = vsyncpa %s907, 1
    %909 = vsyncpa [#allocation5], 1
    %s910 = scalar_lea.sflag [#allocation5], 1
    %911 = vsyncpa %s910, 1
    %912 = vsyncpa [#allocation8], 1
    %s913 = scalar_lea.sflag [#allocation8], 1
    %914 = vsyncpa %s913, 1

</llo_original>
